<compile_context>
chip_gen: v5e
topology: v5e:2x2
jax: 0.10.0
libtpu: 0.0.40
codegen_flags: <defaults>
</compile_context>

<pallas_src>
import functools

import jax
import jax.numpy as jnp
from jax.experimental import pallas as pl
from jax.experimental.pallas import tpu as pltpu


def _round_up(n, m):
    return ((n + m - 1) // m) * m


def _metalayer_kernel(x_ref, w_ref, b_ref, o_ref, *, p_pre, p_post, out_pad):
    """One MetaLayer step (one grid point of the T-step grid).

    x_ref: (1, B, K_pad)  lane-aligned [x_pre | x_post | x_self], zero-padded
                          per segment to a multiple of 128 lanes.
    w_ref: (K_pad, 3*out_pad)  block-diagonal, pre-transposed, combine
                               coefficients (0.7/0.7/0.3) folded in.
    b_ref: (1, 3*out_pad)      coefficients folded in.
    o_ref: (1, B, out_pad)     lane-dense output block.
    """
    x = x_ref[0]  # (B, K_pad)

    def normed(seg):
        # Row-wise L2 norm of a 128-aligned segment; zero pad lanes contribute
        # nothing.  approx reciprocal -> EUP slot (near-free).
        n = jnp.sqrt(jnp.sum(seg * seg, axis=1, keepdims=True))
        return seg * pl.reciprocal(n + 0.0001, approx=True)

    o0 = p_pre
    o1 = p_pre + p_post
    x_dir = jnp.concatenate(
        [normed(x[:, 0:o0]), normed(x[:, o0:o1]), normed(x[:, o1:])], axis=1)

    # Single fused MXU push for all three layers (block-diagonal weight).
    y = jnp.dot(x_dir, w_ref[...], preferred_element_type=jnp.float32) + b_ref[...]
    y = jnp.maximum(y, 0.0)  # ReLU (activation_function)

    # Coefficients already folded into W/b -> plain sum of the three blocks.
    o_ref[0] = (y[:, 0:out_pad]
                + y[:, out_pad:2 * out_pad]
                + y[:, 2 * out_pad:3 * out_pad])


@functools.partial(
    jax.jit,
    static_argnames=("p_pre", "p_post", "p_self", "out_size", "out_pad"))
def _metalayer_steps_impl(x_pre, x_post, x_self, w_packed, b_packed,
                          *, p_pre, p_post, p_self, out_size, out_pad):
    """x_* : (T, B, size).  Returns (T, B, out_size)."""
    t_steps, bsz = x_pre.shape[0], x_pre.shape[1]
    b_pad = _round_up(bsz, 8)

    def pad(x, p):
        x = x.astype(jnp.float32)
        return jnp.pad(x, ((0, 0), (0, b_pad - bsz), (0, p - x.shape[-1])))

    # Lane-align each segment to its padded width; order matches pack_params.
    x_cat = jnp.concatenate(
        [pad(x_pre, p_pre), pad(x_post, p_post), pad(x_self, p_self)], axis=-1)
    k_total = p_pre + p_post + p_self

    kernel = functools.partial(_metalayer_kernel,
                               p_pre=p_pre, p_post=p_post, out_pad=out_pad)

    out = pl.pallas_call(
        kernel,
        out_shape=jax.ShapeDtypeStruct((t_steps, b_pad, out_pad), jnp.float32),
        grid=(t_steps,),
        in_specs=[
            # Per-step activation block.
            pl.BlockSpec((1, b_pad, k_total), lambda t: (t, 0, 0)),
            # Constant index_map: weight/bias DMA'd once, VMEM-resident
            # across all T steps.
            pl.BlockSpec((k_total, 3 * out_pad), lambda t: (0, 0)),
            pl.BlockSpec((1, 3 * out_pad), lambda t: (0, 0)),
        ],
        out_specs=pl.BlockSpec((1, b_pad, out_pad), lambda t: (t, 0, 0)),
        compiler_params=pltpu.CompilerParams(
            dimension_semantics=("arbitrary",)),
    )(x_cat, w_packed, b_packed)

    # Un-pad outside the kernel so the kernel store stays lane-dense.
    return out[:, :bsz, :out_size]


def metalayer_forward_steps(x_self_seq, x_pre_seq, x_post_seq, packed):
    """T independent MetaLayer forward steps in ONE pallas_call (grid=(T,))."""
    return _metalayer_steps_impl(
        x_pre_seq, x_post_seq, x_self_seq, packed["w"], packed["b"],
        p_pre=packed["p_pre"], p_post=packed["p_post"], p_self=packed["p_self"],
        out_size=packed["out_size"], out_pad=packed["out_pad"])


def metalayer_forward(x_self, x_pre, x_post, packed):
    """Single-step forward, matching MetaLayer.forward((in_self,in_pre,in_post))."""
    out = metalayer_forward_steps(x_self[None], x_pre[None], x_post[None], packed)
    return out[0]


def pack_params(params):
    """One-time packing: transposed block-diagonal weight + packed bias.

    Weights are PyTorch-style (out, in).  Row layout: [pre | post | self],
    each segment zero-padded to a multiple of 128 (matches the lane-aligned
    activation concat).  Column layout: [pre | post | self], each padded to
    OUT_PAD (multiple of 128).  The 0.7/0.7/0.3 combine coefficients are
    folded in here (exact because they are positive).
    """
    w_pre, b_pre = params["w_pre"], params["b_pre"]
    w_post, b_post = params["w_post"], params["b_post"]
    w_self, b_self = params["w_self"], params["b_self"]

    out_size = w_pre.shape[0]
    k_pre, k_post, k_self = w_pre.shape[1], w_post.shape[1], w_self.shape[1]
    p_pre, p_post, p_self = (_round_up(k_pre, 128), _round_up(k_post, 128),
                             _round_up(k_self, 128))
    out_pad = _round_up(out_size, 128)
    k_total = p_pre + p_post + p_self

    w = jnp.zeros((k_total, 3 * out_pad), jnp.float32)
    w = w.at[0:k_pre, 0:out_size].set(
        0.7 * w_pre.T.astype(jnp.float32))
    w = w.at[p_pre:p_pre + k_post, out_pad:out_pad + out_size].set(
        0.7 * w_post.T.astype(jnp.float32))
    w = w.at[p_pre + p_post:p_pre + p_post + k_self,
             2 * out_pad:2 * out_pad + out_size].set(
        0.3 * w_self.T.astype(jnp.float32))

    b = jnp.zeros((1, 3 * out_pad), jnp.float32)
    b = b.at[0, 0:out_size].set(0.7 * b_pre.astype(jnp.float32))
    b = b.at[0, out_pad:out_pad + out_size].set(0.7 * b_post.astype(jnp.float32))
    b = b.at[0, 2 * out_pad:2 * out_pad + out_size].set(0.3 * b_self.astype(jnp.float32))

    return dict(w=w, b=b, p_pre=p_pre, p_post=p_post, p_self=p_self,
                out_size=out_size, out_pad=out_pad)


def init_params(key, self_size, pre_size, post_size, out_size):
    """Deterministic nn.Linear-style init (uniform +/- 1/sqrt(fan_in))."""
    ks = jax.random.split(key, 6)

    def lin(kw, kb, in_f, out_f):
        bound = 1.0 / jnp.sqrt(jnp.float32(in_f))
        w = jax.random.uniform(kw, (out_f, in_f), jnp.float32, -bound, bound)
        b = jax.random.uniform(kb, (out_f,), jnp.float32, -bound, bound)
        return w, b

    w_pre, b_pre = lin(ks[0], ks[1], pre_size, out_size)
    w_post, b_post = lin(ks[2], ks[3], post_size, out_size)
    w_self, b_self = lin(ks[4], ks[5], self_size, out_size)
    return dict(w_self=w_self, b_self=b_self,
                w_pre=w_pre, b_pre=b_pre,
                w_post=w_post, b_post=b_post)


def metalayer_reference(x_self, x_pre, x_post, params):
    """Pure-JAX reference (uses the ORIGINAL per-layer weights/coefficients)."""
    def layer(x, w, b):
        n = jnp.linalg.norm(x, axis=1, keepdims=True)
        xd = x / (n + 0.0001)
        return jnp.maximum(xd @ w.T + b[None, :], 0.0)

    return 0.7 * (layer(x_pre, params["w_pre"], params["b_pre"])
                  + layer(x_post, params["w_post"], params["b_post"])) \
         + 0.3 * layer(x_self, params["w_self"], params["b_self"])


if __name__ == "__main__":
    # Small shapes consistent with the module's forward:
    #   x = (in_self, in_pre, in_post), each [batch, *_size]
    batch = 8
    self_size, pre_size, post_size, out_size = 32, 48, 24, 64

    key = jax.random.PRNGKey(0)
    k_params, k_self, k_pre, k_post, k_seq = jax.random.split(key, 5)

    params = init_params(k_params, self_size, pre_size, post_size, out_size)
    packed = pack_params(params)  # one-time packing, reused every step

    x_self = jax.random.normal(k_self, (batch, self_size), jnp.float32)
    x_pre = jax.random.normal(k_pre, (batch, pre_size), jnp.float32)
    x_post = jax.random.normal(k_post, (batch, post_size), jnp.float32)

    # --- single-step forward (module semantics) ---
    out = metalayer_forward(x_self, x_pre, x_post, packed)
    out = jax.block_until_ready(out)
    ref = metalayer_reference(x_self, x_pre, x_post, params)
    assert out.shape == (batch, out_size)
    # Tolerance covers MXU f32 rounding + the EUP approx reciprocal (~1e-4 rel).
    assert jnp.allclose(out, ref, atol=2e-3, rtol=2e-3), "mismatch vs reference"

    # --- multi-step path: T steps in one pallas_call, weights VMEM-resident ---
    T = 4
    ks1, ks2, ks3 = jax.random.split(k_seq, 3)
    xs_self = jax.random.normal(ks1, (T, batch, self_size), jnp.float32)
    xs_pre = jax.random.normal(ks2, (T, batch, pre_size), jnp.float32)
    xs_post = jax.random.normal(ks3, (T, batch, post_size), jnp.float32)

    out_seq = metalayer_forward_steps(xs_self, xs_pre, xs_post, packed)
    out_seq = jax.block_until_ready(out_seq)
    assert out_seq.shape == (T, batch, out_size)
    for t in range(T):
        ref_t = metalayer_reference(xs_self[t], xs_pre[t], xs_post[t], params)
        assert jnp.allclose(out_seq[t], ref_t, atol=2e-3, rtol=2e-3), \
            f"mismatch vs reference at step {t}"

    print("KERNEL_OK")
</pallas_src>

<mosaic_0001>
module attributes {stable_mosaic.version = 11 : i64} {
  func.func @_metalayer_kernel(%arg0: i32, %arg1: memref<1x8x384xf32, #tpu.memory_space<vmem>>, %arg2: memref<384x384xf32, #tpu.memory_space<vmem>>, %arg3: memref<1x384xf32, #tpu.memory_space<vmem>>, %arg4: memref<1x8x128xf32, #tpu.memory_space<vmem>>) attributes {dimension_semantics = [#tpu.dimension_semantics<arbitrary>], iteration_bounds = array<i64: 1>, scalar_prefetch = 0 : i64, scratch_operands = 0 : i64, tpu.core_type = #tpu.core_type<tc>, window_params = [{transform_indices = @transform_0, window_bounds = array<i64: 1, 8, 384>}, {pipeline_mode = #tpu.pipeline_mode<synchronous>, transform_indices = @transform_1, window_bounds = array<i64: 384, 384>}, {pipeline_mode = #tpu.pipeline_mode<synchronous>, transform_indices = @transform_2, window_bounds = array<i64: 1, 384>}, {transform_indices = @transform_3, window_bounds = array<i64: 1, 8, 128>}]} {
    %c0 = arith.constant 0 : index
    %c0_0 = arith.constant 0 : index
    %c0_1 = arith.constant 0 : index
    %0 = vector.load %arg1[%c0, %c0_0, %c0_1] : memref<1x8x384xf32, #tpu.memory_space<vmem>>, vector<1x8x384xf32>
    %1 = vector.shape_cast %0 : vector<1x8x384xf32> to vector<8x384xf32>
    %2 = vector.extract_strided_slice %1 {offsets = [0, 0], sizes = [8, 128], strides = [1, 1]} : vector<8x384xf32> to vector<8x128xf32>
    %3 = arith.mulf %2, %2 : vector<8x128xf32>
    %cst = arith.constant dense<0.000000e+00> : vector<8xf32>
    %4 = vector.multi_reduction <add>, %3, %cst [1] : vector<8x128xf32> to vector<8xf32>
    %5 = vector.shape_cast %4 : vector<8xf32> to vector<8x1xf32>
    %6 = math.sqrt %5 : vector<8x1xf32>
    %cst_2 = arith.constant 9.99999974E-5 : f32
    %7 = vector.broadcast %cst_2 : f32 to vector<8x1xf32>
    %8 = arith.addf %6, %7 : vector<8x1xf32>
    %9 = tpu.reciprocal %8 {approx = true} : vector<8x1xf32> -> vector<8x1xf32>
    %10 = vector.broadcast %9 : vector<8x1xf32> to vector<8x128xf32>
    %11 = arith.mulf %2, %10 : vector<8x128xf32>
    %12 = vector.extract_strided_slice %1 {offsets = [0, 128], sizes = [8, 128], strides = [1, 1]} : vector<8x384xf32> to vector<8x128xf32>
    %13 = arith.mulf %12, %12 : vector<8x128xf32>
    %cst_3 = arith.constant dense<0.000000e+00> : vector<8xf32>
    %14 = vector.multi_reduction <add>, %13, %cst_3 [1] : vector<8x128xf32> to vector<8xf32>
    %15 = vector.shape_cast %14 : vector<8xf32> to vector<8x1xf32>
    %16 = math.sqrt %15 : vector<8x1xf32>
    %cst_4 = arith.constant 9.99999974E-5 : f32
    %17 = vector.broadcast %cst_4 : f32 to vector<8x1xf32>
    %18 = arith.addf %16, %17 : vector<8x1xf32>
    %19 = tpu.reciprocal %18 {approx = true} : vector<8x1xf32> -> vector<8x1xf32>
    %20 = vector.broadcast %19 : vector<8x1xf32> to vector<8x128xf32>
    %21 = arith.mulf %12, %20 : vector<8x128xf32>
    %22 = vector.extract_strided_slice %1 {offsets = [0, 256], sizes = [8, 128], strides = [1, 1]} : vector<8x384xf32> to vector<8x128xf32>
    %23 = arith.mulf %22, %22 : vector<8x128xf32>
    %cst_5 = arith.constant dense<0.000000e+00> : vector<8xf32>
    %24 = vector.multi_reduction <add>, %23, %cst_5 [1] : vector<8x128xf32> to vector<8xf32>
    %25 = vector.shape_cast %24 : vector<8xf32> to vector<8x1xf32>
    %26 = math.sqrt %25 : vector<8x1xf32>
    %cst_6 = arith.constant 9.99999974E-5 : f32
    %27 = vector.broadcast %cst_6 : f32 to vector<8x1xf32>
    %28 = arith.addf %26, %27 : vector<8x1xf32>
    %29 = tpu.reciprocal %28 {approx = true} : vector<8x1xf32> -> vector<8x1xf32>
    %30 = vector.broadcast %29 : vector<8x1xf32> to vector<8x128xf32>
    %31 = arith.mulf %22, %30 : vector<8x128xf32>
    %32 = tpu.concatenate %11, %21, %31 in 1 : vector<8x128xf32>, vector<8x128xf32>, vector<8x128xf32> -> vector<8x384xf32>
    %c0_7 = arith.constant 0 : index
    %c0_8 = arith.constant 0 : index
    %33 = vector.load %arg2[%c0_7, %c0_8] : memref<384x384xf32, #tpu.memory_space<vmem>>, vector<384x384xf32>
    %cst_9 = arith.constant dense<0.000000e+00> : vector<8x384xf32>
    %34 = tpu.matmul %32, %33, %cst_9 {dimension_numbers = #tpu.dot_dimension_numbers<[1], [0], [0], [1], [0, 0, 1, 1], [], []>} : vector<8x384xf32>, vector<384x384xf32>, vector<8x384xf32> -> vector<8x384xf32>
    %c0_10 = arith.constant 0 : index
    %c0_11 = arith.constant 0 : index
    %35 = vector.load %arg3[%c0_10, %c0_11] : memref<1x384xf32, #tpu.memory_space<vmem>>, vector<1x384xf32>
    %36 = vector.broadcast %35 : vector<1x384xf32> to vector<8x384xf32>
    %37 = arith.addf %34, %36 : vector<8x384xf32>
    %cst_12 = arith.constant 0.000000e+00 : f32
    %38 = vector.broadcast %cst_12 : f32 to vector<8x384xf32>
    %39 = arith.maximumf %37, %38 : vector<8x384xf32>
    %40 = vector.extract_strided_slice %39 {offsets = [0, 0], sizes = [8, 128], strides = [1, 1]} : vector<8x384xf32> to vector<8x128xf32>
    %41 = vector.extract_strided_slice %39 {offsets = [0, 128], sizes = [8, 128], strides = [1, 1]} : vector<8x384xf32> to vector<8x128xf32>
    %42 = arith.addf %40, %41 : vector<8x128xf32>
    %43 = vector.extract_strided_slice %39 {offsets = [0, 256], sizes = [8, 128], strides = [1, 1]} : vector<8x384xf32> to vector<8x128xf32>
    %44 = arith.addf %42, %43 : vector<8x128xf32>
    %c0_13 = arith.constant 0 : index
    %c0_14 = arith.constant 0 : index
    %c0_15 = arith.constant 0 : index
    %45 = vector.load %arg4[%c0_13, %c0_14, %c0_15] : memref<1x8x128xf32, #tpu.memory_space<vmem>>, vector<1x8x128xf32>
    %46 = vector.shape_cast %45 : vector<1x8x128xf32> to vector<8x128xf32>
    %47 = vector.shape_cast %44 : vector<8x128xf32> to vector<1x8x128xf32>
    tpu.vector_store %arg4[%c0_13, %c0_14, %c0_15], %47 {strides = array<i32>} : memref<1x8x128xf32, #tpu.memory_space<vmem>>, vector<1x8x128xf32>,
    return
  }
  func.func @transform_0(%arg0: i32) -> (i32, i32, i32) {
    %c0_i32 = arith.constant 0 : i32
    %c0_i32_0 = arith.constant 0 : i32
    %c0_i32_1 = arith.constant 0 : i32
    return %arg0, %c0_i32, %c0_i32_0 : i32, i32, i32
  }
  func.func @transform_1(%arg0: i32) -> (i32, i32) {
    %c0_i32 = arith.constant 0 : i32
    %c0_i32_0 = arith.constant 0 : i32
    %c0_i32_1 = arith.constant 0 : i32
    return %c0_i32, %c0_i32_0 : i32, i32
  }
  func.func @transform_2(%arg0: i32) -> (i32, i32) {
    %c0_i32 = arith.constant 0 : i32
    %c0_i32_0 = arith.constant 0 : i32
    %c0_i32_1 = arith.constant 0 : i32
    return %c0_i32, %c0_i32_0 : i32, i32
  }
  func.func @transform_3(%arg0: i32) -> (i32, i32, i32) {
    %c0_i32 = arith.constant 0 : i32
    %c0_i32_0 = arith.constant 0 : i32
    %c0_i32_1 = arith.constant 0 : i32
    return %arg0, %c0_i32, %c0_i32_0 : i32, i32, i32
  }
}

</mosaic_0001>

<llo_original>
// kernel: _metalayer_steps_impl.1
$region0: #{_metalayer_steps_impl.1}
  #allocation0 [shape = 'u32[]', space=smem, size = 0x4, offset = 0x4, fixed_abs, tag = 'smem constant byte address 0x4 - core index']
  #allocation1 [shape = 'u32[72,128]{1,0:T(1,128)}', space=vmem, size = 0x9000, scoped, tag = 'internal scratch']
  %s0 = inlined_call_operand.vmem [shape: f32[1,8,384], index: 0, kind: input, shape index: {}]
  %s1 = inlined_call_operand.hbm [shape: f32[384,384], index: 1, kind: input, shape index: {}]
  %s2 = inlined_call_operand.vmem [shape: f32[1,384], index: 2, kind: input, shape index: {}]
  %s3 = inlined_call_operand.hbm [shape: f32[1,8,128], index: 3, kind: output, shape index: {}]
  %s4 = sld [smem:[#allocation0]]
  $region26: #{_metalayer_steps_impl.1} parent=0
    _
  %s6 = ssub.s32 1, %s4
  %s7 = scalar_select 0, %s6, %s4
  $region1: #{_metalayer_steps_impl.1} parent=0
    #allocation2 [shape = 'u8[589824]{0}', space=vmem, size = 0x90000, scoped, tag = 'input window, operand 1, single buffered']
    #allocation3 [shape = 's32[1]{0}', space=sflag, size = 0x4, scoped, tag = 'scoped memory for _metalayer_steps_impl.1']
    #allocation4 [shape = 's32[1]{0}', space=sflag, size = 0x4, scoped, tag = 'scoped memory for _metalayer_steps_impl.1']
    #allocation5 [shape = 'u8[4096]{0}', space=vmem, size = 0x1000, scoped, tag = 'output window, operand 0, single buffered']
    %8 = vsyncpa [#allocation3], 0
    %9 = vsyncpa [#allocation4], 0
    // Predicated region
    $region2: #{_metalayer_steps_impl.1} parent=1 // pred_check
      _
    $region3: #{_metalayer_steps_impl.1} parent=1 // pred_check_branch
      %11 = sbr.rel (0) target = $region5
    $region4: #{_metalayer_steps_impl.1} parent=1 // pred_region
      _
    $region5: #{_metalayer_steps_impl.1} parent=1 // pred_fallthru
      _
    // Predicated region
    $region6: #{_metalayer_steps_impl.1} parent=1 // pred_check
      _
    $region7: #{_metalayer_steps_impl.1} parent=1 // pred_check_branch
      %13 = sbr.rel (0) target = $region9
    $region8: #{_metalayer_steps_impl.1} parent=1 // pred_region
      %15 = vsyncadd [#allocation3], 0
      %s16 = sshll.u32 %s1, 4
      %s17 = int_to_ptr.hbm [resolvable:$true] %s16
      %s18 = sshll.u32 [#allocation2], 4
      %s19 = int_to_ptr.vmem [resolvable:$true] %s18
      %24 = dma.hbm_to_vmem [thread:$0]  %s17, 18432, %s19, [#allocation3], 384, 384, 24
    $region9: #{_metalayer_steps_impl.1} parent=1 // pred_fallthru
      _
    // Predicated region
    $region10: #{_metalayer_steps_impl.1} parent=1 // pred_check
      _
    $region11: #{_metalayer_steps_impl.1} parent=1 // pred_check_branch
      %26 = sbr.rel (0) target = $region13
    $region12: #{_metalayer_steps_impl.1} parent=1 // pred_region
      _
    $region13: #{_metalayer_steps_impl.1} parent=1 // pred_fallthru
      _
    // Predicated region
    $region14: #{_metalayer_steps_impl.1} parent=1 // pred_check
      _
    $region15: #{_metalayer_steps_impl.1} parent=1 // pred_check_branch
      %28 = sbr.rel (0) target = $region17
    $region16: #{_metalayer_steps_impl.1} parent=1 // pred_region
      %30 = dma.done [#allocation3], 18432
    $region17: #{_metalayer_steps_impl.1} parent=1 // pred_fallthru
      _
    %v31 = vld [vmem:[%s0] sm:$0xff]
    %v32 = vld [vmem:[%s0 + $0x8] sm:$0xff]
    %v33 = vld [vmem:[%s0 + $0x10] sm:$0xff]
    %v34 = vmul.f32 %v31, %v31
    %35 = vadd.xlane.f32.xlu0 %v34
    %v36 = vpop.xlane.xlu0 %35
    %v37 = vrsqrt.pop %v36
    %v38 = vmul.f32 %v37, %v36
    %v39 = vmul.f32 %v38, %v37
    %v40 = vmul.f32 0.5, %v39
    %v41 = vsub.f32 1.5, %v40
    %v42 = vmul.f32 %v37, %v41
    %v43 = vmul.f32 %v36, %v42
    %vm44 = vcmp.eq.f32.partialorder %v36, inf
    %v45 = vsel %vm44, %v36, %v43
    %vm46 = vcmp.eq.f32.partialorder %v36, 0.0
    %v47 = vand.u32 %v36, 2147483648
    %v48 = vsel %vm46, %v47, %v45
    %v49 = vadd.f32 %v48, 0.0001
    %v50 = vrcp.pop %v49
    %v51 = vmul.f32 %v31, %v50
    %v52 = vmul.f32 %v32, %v32
    %53 = vadd.xlane.f32.xlu0 %v52
    %v54 = vpop.xlane.xlu0 %53
    %v55 = vrsqrt.pop %v54
    %v56 = vmul.f32 %v55, %v54
    %v57 = vmul.f32 %v56, %v55
    %v58 = vmul.f32 0.5, %v57
    %v59 = vsub.f32 1.5, %v58
    %v60 = vmul.f32 %v55, %v59
    %v61 = vmul.f32 %v54, %v60
    %vm62 = vcmp.eq.f32.partialorder %v54, inf
    %v63 = vsel %vm62, %v54, %v61
    %vm64 = vcmp.eq.f32.partialorder %v54, 0.0
    %v65 = vand.u32 %v54, 2147483648
    %v66 = vsel %vm64, %v65, %v63
    %v67 = vadd.f32 %v66, 0.0001
    %v68 = vrcp.pop %v67
    %v69 = vmul.f32 %v32, %v68
    %v70 = vmul.f32 %v33, %v33
    %71 = vadd.xlane.f32.xlu0 %v70
    %v72 = vpop.xlane.xlu0 %71
    %v73 = vrsqrt.pop %v72
    %v74 = vmul.f32 %v73, %v72
    %v75 = vmul.f32 %v74, %v73
    %v76 = vmul.f32 0.5, %v75
    %v77 = vsub.f32 1.5, %v76
    %v78 = vmul.f32 %v73, %v77
    %v79 = vmul.f32 %v72, %v78
    %vm80 = vcmp.eq.f32.partialorder %v72, inf
    %v81 = vsel %vm80, %v72, %v79
    %vm82 = vcmp.eq.f32.partialorder %v72, 0.0
    %v83 = vand.u32 %v72, 2147483648
    %v84 = vsel %vm82, %v83, %v81
    %v85 = vadd.f32 %v84, 0.0001
    %v86 = vrcp.pop %v85
    %v87 = vmul.f32 %v33, %v86
    %v88 = vld [vmem:[#allocation2] sm:$0xff]
    %v89 = vld [vmem:[#allocation2 + $0x8] sm:$0xff]
    %v90 = vld [vmem:[#allocation2 + $0x10] sm:$0xff]
    %v91 = vld [vmem:[#allocation2 + $0x18] sm:$0xff]
    %v92 = vld [vmem:[#allocation2 + $0x20] sm:$0xff]
    %v93 = vld [vmem:[#allocation2 + $0x28] sm:$0xff]
    %v94 = vld [vmem:[#allocation2 + $0x30] sm:$0xff]
    %v95 = vld [vmem:[#allocation2 + $0x38] sm:$0xff]
    %v96 = vld [vmem:[#allocation2 + $0x40] sm:$0xff]
    %v97 = vld [vmem:[#allocation2 + $0x48] sm:$0xff]
    %v98 = vld [vmem:[#allocation2 + $0x50] sm:$0xff]
    %v99 = vld [vmem:[#allocation2 + $0x58] sm:$0xff]
    %v100 = vld [vmem:[#allocation2 + $0x60] sm:$0xff]
    %v101 = vld [vmem:[#allocation2 + $0x68] sm:$0xff]
    %v102 = vld [vmem:[#allocation2 + $0x70] sm:$0xff]
    %v103 = vld [vmem:[#allocation2 + $0x78] sm:$0xff]
    %v104 = vld [vmem:[#allocation2 + $0x80] sm:$0xff]
    %v105 = vld [vmem:[#allocation2 + $0x88] sm:$0xff]
    %v106 = vld [vmem:[#allocation2 + $0x90] sm:$0xff]
    %v107 = vld [vmem:[#allocation2 + $0x98] sm:$0xff]
    %v108 = vld [vmem:[#allocation2 + $0xa0] sm:$0xff]
    %v109 = vld [vmem:[#allocation2 + $0xa8] sm:$0xff]
    %v110 = vld [vmem:[#allocation2 + $0xb0] sm:$0xff]
    %v111 = vld [vmem:[#allocation2 + $0xb8] sm:$0xff]
    %v112 = vld [vmem:[#allocation2 + $0xc0] sm:$0xff]
    %v113 = vld [vmem:[#allocation2 + $0xc8] sm:$0xff]
    %v114 = vld [vmem:[#allocation2 + $0xd0] sm:$0xff]
    %v115 = vld [vmem:[#allocation2 + $0xd8] sm:$0xff]
    %v116 = vld [vmem:[#allocation2 + $0xe0] sm:$0xff]
    %v117 = vld [vmem:[#allocation2 + $0xe8] sm:$0xff]
    %v118 = vld [vmem:[#allocation2 + $0xf0] sm:$0xff]
    %v119 = vld [vmem:[#allocation2 + $0xf8] sm:$0xff]
    %v120 = vld [vmem:[#allocation2 + $0x100] sm:$0xff]
    %v121 = vld [vmem:[#allocation2 + $0x108] sm:$0xff]
    %v122 = vld [vmem:[#allocation2 + $0x110] sm:$0xff]
    %v123 = vld [vmem:[#allocation2 + $0x118] sm:$0xff]
    %v124 = vld [vmem:[#allocation2 + $0x120] sm:$0xff]
    %v125 = vld [vmem:[#allocation2 + $0x128] sm:$0xff]
    %v126 = vld [vmem:[#allocation2 + $0x130] sm:$0xff]
    %v127 = vld [vmem:[#allocation2 + $0x138] sm:$0xff]
    %v128 = vld [vmem:[#allocation2 + $0x140] sm:$0xff]
    %v129 = vld [vmem:[#allocation2 + $0x148] sm:$0xff]
    %v130 = vld [vmem:[#allocation2 + $0x150] sm:$0xff]
    %v131 = vld [vmem:[#allocation2 + $0x158] sm:$0xff]
    %v132 = vld [vmem:[#allocation2 + $0x160] sm:$0xff]
    %v133 = vld [vmem:[#allocation2 + $0x168] sm:$0xff]
    %v134 = vld [vmem:[#allocation2 + $0x170] sm:$0xff]
    %v135 = vld [vmem:[#allocation2 + $0x178] sm:$0xff]
    %v136 = vld [vmem:[#allocation2 + $0x180] sm:$0xff]
    %v137 = vld [vmem:[#allocation2 + $0x188] sm:$0xff]
    %v138 = vld [vmem:[#allocation2 + $0x190] sm:$0xff]
    %v139 = vld [vmem:[#allocation2 + $0x198] sm:$0xff]
    %v140 = vld [vmem:[#allocation2 + $0x1a0] sm:$0xff]
    %v141 = vld [vmem:[#allocation2 + $0x1a8] sm:$0xff]
    %v142 = vld [vmem:[#allocation2 + $0x1b0] sm:$0xff]
    %v143 = vld [vmem:[#allocation2 + $0x1b8] sm:$0xff]
    %v144 = vld [vmem:[#allocation2 + $0x1c0] sm:$0xff]
    %v145 = vld [vmem:[#allocation2 + $0x1c8] sm:$0xff]
    %v146 = vld [vmem:[#allocation2 + $0x1d0] sm:$0xff]
    %v147 = vld [vmem:[#allocation2 + $0x1d8] sm:$0xff]
    %v148 = vld [vmem:[#allocation2 + $0x1e0] sm:$0xff]
    %v149 = vld [vmem:[#allocation2 + $0x1e8] sm:$0xff]
    %v150 = vld [vmem:[#allocation2 + $0x1f0] sm:$0xff]
    %v151 = vld [vmem:[#allocation2 + $0x1f8] sm:$0xff]
    %v152 = vld [vmem:[#allocation2 + $0x200] sm:$0xff]
    %v153 = vld [vmem:[#allocation2 + $0x208] sm:$0xff]
    %v154 = vld [vmem:[#allocation2 + $0x210] sm:$0xff]
    %v155 = vld [vmem:[#allocation2 + $0x218] sm:$0xff]
    %v156 = vld [vmem:[#allocation2 + $0x220] sm:$0xff]
    %v157 = vld [vmem:[#allocation2 + $0x228] sm:$0xff]
    %v158 = vld [vmem:[#allocation2 + $0x230] sm:$0xff]
    %v159 = vld [vmem:[#allocation2 + $0x238] sm:$0xff]
    %v160 = vld [vmem:[#allocation2 + $0x240] sm:$0xff]
    %v161 = vld [vmem:[#allocation2 + $0x248] sm:$0xff]
    %v162 = vld [vmem:[#allocation2 + $0x250] sm:$0xff]
    %v163 = vld [vmem:[#allocation2 + $0x258] sm:$0xff]
    %v164 = vld [vmem:[#allocation2 + $0x260] sm:$0xff]
    %v165 = vld [vmem:[#allocation2 + $0x268] sm:$0xff]
    %v166 = vld [vmem:[#allocation2 + $0x270] sm:$0xff]
    %v167 = vld [vmem:[#allocation2 + $0x278] sm:$0xff]
    %v168 = vld [vmem:[#allocation2 + $0x280] sm:$0xff]
    %v169 = vld [vmem:[#allocation2 + $0x288] sm:$0xff]
    %v170 = vld [vmem:[#allocation2 + $0x290] sm:$0xff]
    %v171 = vld [vmem:[#allocation2 + $0x298] sm:$0xff]
    %v172 = vld [vmem:[#allocation2 + $0x2a0] sm:$0xff]
    %v173 = vld [vmem:[#allocation2 + $0x2a8] sm:$0xff]
    %v174 = vld [vmem:[#allocation2 + $0x2b0] sm:$0xff]
    %v175 = vld [vmem:[#allocation2 + $0x2b8] sm:$0xff]
    %v176 = vld [vmem:[#allocation2 + $0x2c0] sm:$0xff]
    %v177 = vld [vmem:[#allocation2 + $0x2c8] sm:$0xff]
    %v178 = vld [vmem:[#allocation2 + $0x2d0] sm:$0xff]
    %v179 = vld [vmem:[#allocation2 + $0x2d8] sm:$0xff]
    %v180 = vld [vmem:[#allocation2 + $0x2e0] sm:$0xff]
    %v181 = vld [vmem:[#allocation2 + $0x2e8] sm:$0xff]
    %v182 = vld [vmem:[#allocation2 + $0x2f0] sm:$0xff]
    %v183 = vld [vmem:[#allocation2 + $0x2f8] sm:$0xff]
    %v184 = vld [vmem:[#allocation2 + $0x300] sm:$0xff]
    %v185 = vld [vmem:[#allocation2 + $0x308] sm:$0xff]
    %v186 = vld [vmem:[#allocation2 + $0x310] sm:$0xff]
    %v187 = vld [vmem:[#allocation2 + $0x318] sm:$0xff]
    %v188 = vld [vmem:[#allocation2 + $0x320] sm:$0xff]
    %v189 = vld [vmem:[#allocation2 + $0x328] sm:$0xff]
    %v190 = vld [vmem:[#allocation2 + $0x330] sm:$0xff]
    %v191 = vld [vmem:[#allocation2 + $0x338] sm:$0xff]
    %v192 = vld [vmem:[#allocation2 + $0x340] sm:$0xff]
    %v193 = vld [vmem:[#allocation2 + $0x348] sm:$0xff]
    %v194 = vld [vmem:[#allocation2 + $0x350] sm:$0xff]
    %v195 = vld [vmem:[#allocation2 + $0x358] sm:$0xff]
    %v196 = vld [vmem:[#allocation2 + $0x360] sm:$0xff]
    %v197 = vld [vmem:[#allocation2 + $0x368] sm:$0xff]
    %v198 = vld [vmem:[#allocation2 + $0x370] sm:$0xff]
    %v199 = vld [vmem:[#allocation2 + $0x378] sm:$0xff]
    %v200 = vld [vmem:[#allocation2 + $0x380] sm:$0xff]
    %v201 = vld [vmem:[#allocation2 + $0x388] sm:$0xff]
    %v202 = vld [vmem:[#allocation2 + $0x390] sm:$0xff]
    %v203 = vld [vmem:[#allocation2 + $0x398] sm:$0xff]
    %v204 = vld [vmem:[#allocation2 + $0x3a0] sm:$0xff]
    %v205 = vld [vmem:[#allocation2 + $0x3a8] sm:$0xff]
    %v206 = vld [vmem:[#allocation2 + $0x3b0] sm:$0xff]
    %v207 = vld [vmem:[#allocation2 + $0x3b8] sm:$0xff]
    %v208 = vld [vmem:[#allocation2 + $0x3c0] sm:$0xff]
    %v209 = vld [vmem:[#allocation2 + $0x3c8] sm:$0xff]
    %v210 = vld [vmem:[#allocation2 + $0x3d0] sm:$0xff]
    %v211 = vld [vmem:[#allocation2 + $0x3d8] sm:$0xff]
    %v212 = vld [vmem:[#allocation2 + $0x3e0] sm:$0xff]
    %v213 = vld [vmem:[#allocation2 + $0x3e8] sm:$0xff]
    %v214 = vld [vmem:[#allocation2 + $0x3f0] sm:$0xff]
    %v215 = vld [vmem:[#allocation2 + $0x3f8] sm:$0xff]
    %v216 = vld [vmem:[#allocation2 + $0x400] sm:$0xff]
    %v217 = vld [vmem:[#allocation2 + $0x408] sm:$0xff]
    %v218 = vld [vmem:[#allocation2 + $0x410] sm:$0xff]
    %v219 = vld [vmem:[#allocation2 + $0x418] sm:$0xff]
    %v220 = vld [vmem:[#allocation2 + $0x420] sm:$0xff]
    %v221 = vld [vmem:[#allocation2 + $0x428] sm:$0xff]
    %v222 = vld [vmem:[#allocation2 + $0x430] sm:$0xff]
    %v223 = vld [vmem:[#allocation2 + $0x438] sm:$0xff]
    %v224 = vld [vmem:[#allocation2 + $0x440] sm:$0xff]
    %v225 = vld [vmem:[#allocation2 + $0x448] sm:$0xff]
    %v226 = vld [vmem:[#allocation2 + $0x450] sm:$0xff]
    %v227 = vld [vmem:[#allocation2 + $0x458] sm:$0xff]
    %v228 = vld [vmem:[#allocation2 + $0x460] sm:$0xff]
    %v229 = vld [vmem:[#allocation2 + $0x468] sm:$0xff]
    %v230 = vld [vmem:[#allocation2 + $0x470] sm:$0xff]
    %v231 = vld [vmem:[#allocation2 + $0x478] sm:$0xff]
    %v232 = vld [vmem:[%s2] sm:$0x7]
    %v234 = vperm.slane %v232, 0
    %v235 = vperm.slane %v232, 1
    %v236 = vperm.slane %v232, 2
    %240 = vmatpush.msra.mxu0 %v133
    %241 = vmatpush.msra.mxu0 %v130
    %242 = vmatpush.msra.mxu0 %v127
    %243 = vmatpush.msra.mxu0 %v124
    %244 = vmatpush.msra.mxu0 %v121
    %245 = vmatpush.msra.mxu0 %v118
    %246 = vmatpush.msra.mxu0 %v115
    %247 = vmatpush.msra.mxu0 %v112
    %248 = vmatpush.msra.mxu0 %v109
    %249 = vmatpush.msra.mxu0 %v106
    %250 = vmatpush.msra.mxu0 %v103
    %251 = vmatpush.msra.mxu0 %v100
    %252 = vmatpush.msra.mxu0 %v97
    %253 = vmatpush.msra.mxu0 %v94
    %254 = vmatpush.msra.mxu0 %v91
    %255 = vmatpush.msra.mxu0 %v88
    %256 = vmatmul.f32.gmra.mxu0 %v51
    %v257 = vpop.f32.mrf.mxu0
    %v258 = vadd.f32 %v234, %v257
    %259 = vdwg.mxu0
    %260 = vmatpush.msra.mxu0 %v181
    %261 = vmatpush.msra.mxu0 %v178
    %262 = vmatpush.msra.mxu0 %v175
    %263 = vmatpush.msra.mxu0 %v172
    %264 = vmatpush.msra.mxu0 %v169
    %265 = vmatpush.msra.mxu0 %v166
    %266 = vmatpush.msra.mxu0 %v163
    %267 = vmatpush.msra.mxu0 %v160
    %268 = vmatpush.msra.mxu0 %v157
    %269 = vmatpush.msra.mxu0 %v154
    %270 = vmatpush.msra.mxu0 %v151
    %271 = vmatpush.msra.mxu0 %v148
    %272 = vmatpush.msra.mxu0 %v145
    %273 = vmatpush.msra.mxu0 %v142
    %274 = vmatpush.msra.mxu0 %v139
    %275 = vmatpush.msra.mxu0 %v136
    %276 = vmatmul.f32.gmra.mxu0 %v69
    %v277 = vpop.f32.mrf.mxu0
    %v278 = vadd.f32 %v258, %v277
    %279 = vdwg.mxu0
    %280 = vmatpush.msra.mxu0 %v229
    %281 = vmatpush.msra.mxu0 %v226
    %282 = vmatpush.msra.mxu0 %v223
    %283 = vmatpush.msra.mxu0 %v220
    %284 = vmatpush.msra.mxu0 %v217
    %285 = vmatpush.msra.mxu0 %v214
    %286 = vmatpush.msra.mxu0 %v211
    %287 = vmatpush.msra.mxu0 %v208
    %288 = vmatpush.msra.mxu0 %v205
    %289 = vmatpush.msra.mxu0 %v202
    %290 = vmatpush.msra.mxu0 %v199
    %291 = vmatpush.msra.mxu0 %v196
    %292 = vmatpush.msra.mxu0 %v193
    %293 = vmatpush.msra.mxu0 %v190
    %294 = vmatpush.msra.mxu0 %v187
    %295 = vmatpush.msra.mxu0 %v184
    %296 = vmatmul.f32.gmra.mxu0 %v87
    %v297 = vpop.f32.mrf.mxu0
    %v298 = vadd.f32 %v278, %v297
    %299 = vdwg.mxu0
    %300 = vmatpush.msra.mxu0 %v134
    %301 = vmatpush.msra.mxu0 %v131
    %302 = vmatpush.msra.mxu0 %v128
    %303 = vmatpush.msra.mxu0 %v125
    %304 = vmatpush.msra.mxu0 %v122
    %305 = vmatpush.msra.mxu0 %v119
    %306 = vmatpush.msra.mxu0 %v116
    %307 = vmatpush.msra.mxu0 %v113
    %308 = vmatpush.msra.mxu0 %v110
    %309 = vmatpush.msra.mxu0 %v107
    %310 = vmatpush.msra.mxu0 %v104
    %311 = vmatpush.msra.mxu0 %v101
    %312 = vmatpush.msra.mxu0 %v98
    %313 = vmatpush.msra.mxu0 %v95
    %314 = vmatpush.msra.mxu0 %v92
    %315 = vmatpush.msra.mxu0 %v89
    %316 = vmatmul.f32.gmra.mxu0 %v51
    %v317 = vpop.f32.mrf.mxu0
    %v318 = vadd.f32 %v235, %v317
    %319 = vdwg.mxu0
    %320 = vmatpush.msra.mxu0 %v182
    %321 = vmatpush.msra.mxu0 %v179
    %322 = vmatpush.msra.mxu0 %v176
    %323 = vmatpush.msra.mxu0 %v173
    %324 = vmatpush.msra.mxu0 %v170
    %325 = vmatpush.msra.mxu0 %v167
    %326 = vmatpush.msra.mxu0 %v164
    %327 = vmatpush.msra.mxu0 %v161
    %328 = vmatpush.msra.mxu0 %v158
    %329 = vmatpush.msra.mxu0 %v155
    %330 = vmatpush.msra.mxu0 %v152
    %331 = vmatpush.msra.mxu0 %v149
    %332 = vmatpush.msra.mxu0 %v146
    %333 = vmatpush.msra.mxu0 %v143
    %334 = vmatpush.msra.mxu0 %v140
    %335 = vmatpush.msra.mxu0 %v137
    %336 = vmatmul.f32.gmra.mxu0 %v69
    %v337 = vpop.f32.mrf.mxu0
    %v338 = vadd.f32 %v318, %v337
    %339 = vdwg.mxu0
    %340 = vmatpush.msra.mxu0 %v230
    %341 = vmatpush.msra.mxu0 %v227
    %342 = vmatpush.msra.mxu0 %v224
    %343 = vmatpush.msra.mxu0 %v221
    %344 = vmatpush.msra.mxu0 %v218
    %345 = vmatpush.msra.mxu0 %v215
    %346 = vmatpush.msra.mxu0 %v212
    %347 = vmatpush.msra.mxu0 %v209
    %348 = vmatpush.msra.mxu0 %v206
    %349 = vmatpush.msra.mxu0 %v203
    %350 = vmatpush.msra.mxu0 %v200
    %351 = vmatpush.msra.mxu0 %v197
    %352 = vmatpush.msra.mxu0 %v194
    %353 = vmatpush.msra.mxu0 %v191
    %354 = vmatpush.msra.mxu0 %v188
    %355 = vmatpush.msra.mxu0 %v185
    %356 = vmatmul.f32.gmra.mxu0 %v87
    %v357 = vpop.f32.mrf.mxu0
    %v358 = vadd.f32 %v338, %v357
    %359 = vdwg.mxu0
    %360 = vmatpush.msra.mxu0 %v135
    %361 = vmatpush.msra.mxu0 %v132
    %362 = vmatpush.msra.mxu0 %v129
    %363 = vmatpush.msra.mxu0 %v126
    %364 = vmatpush.msra.mxu0 %v123
    %365 = vmatpush.msra.mxu0 %v120
    %366 = vmatpush.msra.mxu0 %v117
    %367 = vmatpush.msra.mxu0 %v114
    %368 = vmatpush.msra.mxu0 %v111
    %369 = vmatpush.msra.mxu0 %v108
    %370 = vmatpush.msra.mxu0 %v105
    %371 = vmatpush.msra.mxu0 %v102
    %372 = vmatpush.msra.mxu0 %v99
    %373 = vmatpush.msra.mxu0 %v96
    %374 = vmatpush.msra.mxu0 %v93
    %375 = vmatpush.msra.mxu0 %v90
    %376 = vmatmul.f32.gmra.mxu0 %v51
    %v377 = vpop.f32.mrf.mxu0
    %v378 = vadd.f32 %v236, %v377
    %379 = vdwg.mxu0
    %380 = vmatpush.msra.mxu0 %v183
    %381 = vmatpush.msra.mxu0 %v180
    %382 = vmatpush.msra.mxu0 %v177
    %383 = vmatpush.msra.mxu0 %v174
    %384 = vmatpush.msra.mxu0 %v171
    %385 = vmatpush.msra.mxu0 %v168
    %386 = vmatpush.msra.mxu0 %v165
    %387 = vmatpush.msra.mxu0 %v162
    %388 = vmatpush.msra.mxu0 %v159
    %389 = vmatpush.msra.mxu0 %v156
    %390 = vmatpush.msra.mxu0 %v153
    %391 = vmatpush.msra.mxu0 %v150
    %392 = vmatpush.msra.mxu0 %v147
    %393 = vmatpush.msra.mxu0 %v144
    %394 = vmatpush.msra.mxu0 %v141
    %395 = vmatpush.msra.mxu0 %v138
    %396 = vmatmul.f32.gmra.mxu0 %v69
    %v397 = vpop.f32.mrf.mxu0
    %v398 = vadd.f32 %v378, %v397
    %399 = vdwg.mxu0
    %400 = vmatpush.msra.mxu0 %v231
    %401 = vmatpush.msra.mxu0 %v228
    %402 = vmatpush.msra.mxu0 %v225
    %403 = vmatpush.msra.mxu0 %v222
    %404 = vmatpush.msra.mxu0 %v219
    %405 = vmatpush.msra.mxu0 %v216
    %406 = vmatpush.msra.mxu0 %v213
    %407 = vmatpush.msra.mxu0 %v210
    %408 = vmatpush.msra.mxu0 %v207
    %409 = vmatpush.msra.mxu0 %v204
    %410 = vmatpush.msra.mxu0 %v201
    %411 = vmatpush.msra.mxu0 %v198
    %412 = vmatpush.msra.mxu0 %v195
    %413 = vmatpush.msra.mxu0 %v192
    %414 = vmatpush.msra.mxu0 %v189
    %415 = vmatpush.msra.mxu0 %v186
    %416 = vmatmul.f32.gmra.mxu0 %v87
    %v417 = vpop.f32.mrf.mxu0
    %v418 = vadd.f32 %v398, %v417
    %419 = vdwg.mxu0
    %v420 = vmax.f32 %v298, 0.0
    %v421 = vmax.f32 %v358, 0.0
    %v422 = vmax.f32 %v418, 0.0
    %v423 = vadd.f32 %v420, %v421
    %v424 = vadd.f32 %v423, %v422
    %425 = vst [vmem:[#allocation5] sm:$0xff] %v424
    // Predicated region
    $region18: #{_metalayer_steps_impl.1} parent=1 // pred_check
      _
    $region19: #{_metalayer_steps_impl.1} parent=1 // pred_check_branch
      %427 = sbr.rel (0) target = $region21
    $region20: #{_metalayer_steps_impl.1} parent=1 // pred_region
      %429 = vsyncadd [#allocation4], 0
      %s431 = sshll.u32 [#allocation5], 4
      %s432 = int_to_ptr.vmem [resolvable:$true] %s431
      %s433 = sshll.u32 %s3, 4
      %s434 = int_to_ptr.hbm [resolvable:$true] %s433
      %436 = dma.vmem_to_hbm [thread:$0]  %s432, 128, %s434, [#allocation4]
    $region21: #{_metalayer_steps_impl.1} parent=1 // pred_fallthru
      _
    // Predicated region
    $region22: #{_metalayer_steps_impl.1} parent=1 // pred_check
      _
    $region23: #{_metalayer_steps_impl.1} parent=1 // pred_check_branch
      %438 = sbr.rel (0) target = $region25
    $region24: #{_metalayer_steps_impl.1} parent=1 // pred_region
      %440 = dma.done [#allocation4], 128
    $region25: #{_metalayer_steps_impl.1} parent=1 // pred_fallthru
      _
    %441 = vsyncpa [#allocation3], 1
    %442 = vsyncpa [#allocation4], 1

</llo_original>
